<compile_context>
chip_gen: v7x
topology: tpu7x:2x2x1
jax: 0.10.0
libtpu: 0.0.40
codegen_flags: <defaults>
</compile_context>

<pallas_src>
import jax
import jax.numpy as jnp
from jax.experimental import pallas as pl
from jax.experimental.pallas import tpu as pltpu

OUT_PAD = 128      # pad 10 -> 128 output lanes for a lane-dense (unmasked) store
MAX_TILE_B = 1024  # big tiles amortize the ~0.35us/step overhead; footprint stays
                   # well under VMEM (x 2x1024x784 f32 ~6.3MiB + out ~1MiB + weights)
M_GRANULE = 256    # MXU M granule (v6e/v7x 2x256x256)


def _cdiv(a, b):
    return -(-a // b)


def _round_up(n, m):
    return _cdiv(n, m) * m


def _choose_tile_b(batch):
    """Batch tile: big enough to amortize per-step DMA/loop overhead, small enough
    that the grid has >= 2 steps (megacore sharding) once the batch is large."""
    if batch <= M_GRANULE:
        # single grid step; 16-row alignment keeps the bf16 hidden carries dense
        return max(16, _round_up(batch, 16))
    half = _round_up(_cdiv(batch, 2), M_GRANULE)
    return min(MAX_TILE_B, half)


def mlp_kernel(x_ref, w1_ref, b1_ref, w2_ref, b2_ref, w3_ref, b3_ref, o_ref):
    # bf16 cast of the streamed x block happens here (VPU, hides under DMA/MXU)
    x = x_ref[...].astype(jnp.bfloat16)
    # Layer 1: (TB,784)bf16 @ (784,256)bf16 -> f32 acc; bias+ReLU in f32; bf16 carry
    h1 = jnp.dot(x, w1_ref[...], preferred_element_type=jnp.float32)
    h1 = jnp.maximum(h1 + b1_ref[...], 0.0).astype(jnp.bfloat16)
    # Layer 2: (TB,256) @ (256,256)
    h2 = jnp.dot(h1, w2_ref[...], preferred_element_type=jnp.float32)
    h2 = jnp.maximum(h2 + b2_ref[...], 0.0).astype(jnp.bfloat16)
    # Layer 3: (TB,256) @ (256,128-padded)
    o = jnp.dot(h2, w3_ref[...], preferred_element_type=jnp.float32)
    o_ref[...] = (o + b3_ref[...]).astype(o_ref.dtype)


def mnist_relu_forward(x_nchw, prepared_params):
    """Fused MLP forward. x_nchw: (B, 1, 28, 28) float32 -> (B, 10) float32."""
    w1, b1, w2, b2, w3, b3 = prepared_params
    B = x_nchw.shape[0]
    # nn.Flatten: (B,1,28,28) -> (B,784), row-major (matches PyTorch). Free metadata
    # op; x stays f32 in HBM (no wrapper-side cast/pad pass over x).
    x = x_nchw.reshape(B, 784)

    tile_b = _choose_tile_b(B)
    num_tiles = _cdiv(B, tile_b)
    rows_out = num_tiles * tile_b   # output buffer rounded to tile; sliced below

    const = lambda i: (0, 0)  # weights/biases: single block, resident across steps

    flops = 2 * rows_out * (784 * 256 + 256 * 256 + 256 * OUT_PAD)
    bytes_accessed = (
        B * 784 * 4                                        # x (f32, read once)
        + rows_out * OUT_PAD * 4                           # out (f32)
        + (784 * 256 + 256 * 256 + 256 * OUT_PAD) * 2      # bf16 weights (read once)
        + (256 + 256 + OUT_PAD) * 4                        # f32 biases
    )

    out = pl.pallas_call(
        mlp_kernel,
        out_shape=jax.ShapeDtypeStruct((rows_out, OUT_PAD), jnp.float32),
        grid=(num_tiles,),
        in_specs=[
            pl.BlockSpec((tile_b, 784), lambda i: (i, 0)),   # x: streamed per tile (f32)
            pl.BlockSpec((784, 256), const),                 # w1 (bf16)
            pl.BlockSpec((1, 256), const),                   # b1 (f32)
            pl.BlockSpec((256, 256), const),                 # w2 (bf16)
            pl.BlockSpec((1, 256), const),                   # b2 (f32)
            pl.BlockSpec((256, OUT_PAD), const),             # w3 padded (bf16)
            pl.BlockSpec((1, OUT_PAD), const),               # b3 padded (f32)
        ],
        out_specs=pl.BlockSpec((tile_b, OUT_PAD), lambda i: (i, 0)),
        compiler_params=pltpu.CompilerParams(
            dimension_semantics=("parallel",),   # batch tiles shard across TCs (v7x)
            vmem_limit_bytes=64 << 20,           # covers v5e's 16 MiB default at big tiles
        ),
        cost_estimate=pl.CostEstimate(
            flops=flops, transcendentals=0, bytes_accessed=bytes_accessed),
    )(x, w1, b1, w2, b2, w3, b3)

    return out[:B, :10]  # (B, 10), same as the PyTorch module


def init_params(key):
    """Deterministic init mimicking nn.Linear's U(-1/sqrt(fan_in), 1/sqrt(fan_in)).
    Weights stored as (in_features, out_features) so the kernel computes x @ W + b."""
    ks = jax.random.split(key, 6)

    def lin(kw, kb, fan_in, fan_out):
        bound = 1.0 / jnp.sqrt(fan_in)
        w = jax.random.uniform(kw, (fan_in, fan_out), jnp.float32, -bound, bound)
        b = jax.random.uniform(kb, (1, fan_out), jnp.float32, -bound, bound)
        return w, b

    w1, b1 = lin(ks[0], ks[1], 784, 256)
    w2, b2 = lin(ks[2], ks[3], 256, 256)
    w3, b3 = lin(ks[4], ks[5], 256, 10)
    return (w1, b1, w2, b2, w3, b3)


def prepare_params(params):
    """One-time packing (not per forward call): bf16 weights for the MXU, f32 biases,
    last layer zero-padded 10 -> 128 lanes for the lane-dense output store."""
    w1, b1, w2, b2, w3, b3 = params
    w3p = jnp.zeros((w3.shape[0], OUT_PAD), jnp.float32).at[:, : w3.shape[1]].set(w3)
    b3p = jnp.zeros((1, OUT_PAD), jnp.float32).at[:, : b3.shape[1]].set(b3)
    return (
        w1.astype(jnp.bfloat16), b1,
        w2.astype(jnp.bfloat16), b2,
        w3p.astype(jnp.bfloat16), b3p,
    )


def reference_forward_f32(x_nchw, params):
    """Pure-JAX f32 reference (module semantics)."""
    w1, b1, w2, b2, w3, b3 = params
    x = x_nchw.reshape(x_nchw.shape[0], -1)
    h = jnp.maximum(x @ w1 + b1, 0.0)
    h = jnp.maximum(h @ w2 + b2, 0.0)
    return h @ w3 + b3


def reference_forward_bf16(x_nchw, prepared_params):
    """Pure-JAX reference using the same bf16-operand / f32-accumulate recipe."""
    w1, b1, w2, b2, w3, b3 = prepared_params
    x = x_nchw.reshape(x_nchw.shape[0], -1).astype(jnp.bfloat16)
    h = jnp.dot(x, w1, preferred_element_type=jnp.float32) + b1
    h = jnp.maximum(h, 0.0).astype(jnp.bfloat16)
    h = jnp.dot(h, w2, preferred_element_type=jnp.float32) + b2
    h = jnp.maximum(h, 0.0).astype(jnp.bfloat16)
    o = jnp.dot(h, w3, preferred_element_type=jnp.float32) + b3
    return o[:, :10]


if __name__ == "__main__":
    key = jax.random.PRNGKey(0)
    k_x, k_p = jax.random.split(key)

    B = 16  # small deterministic batch, tile-aligned (no partial block in the demo)
    x = jax.random.normal(k_x, (B, 1, 28, 28), jnp.float32)  # NCHW like PyTorch
    params = init_params(k_p)
    prepared = prepare_params(params)

    y = mnist_relu_forward(x, prepared)
    y = jax.block_until_ready(y)
    assert y.shape == (B, 10)

    # Tight check vs a bf16-matched reference (same precision recipe).
    y_ref_bf16 = reference_forward_bf16(x, prepared)
    assert jnp.allclose(y, y_ref_bf16, atol=1e-2, rtol=1e-2), "mismatch vs bf16 reference"

    # Loose semantic check vs the full-f32 module reference (bf16 operand quantization).
    y_ref_f32 = reference_forward_f32(x, params)
    assert jnp.allclose(y, y_ref_f32, atol=5e-2, rtol=5e-2), "mismatch vs f32 reference"

    print("KERNEL_OK")
</pallas_src>

<mosaic_0001>
module attributes {stable_mosaic.version = 11 : i64} {
  func.func @mlp_kernel(%arg0: i32, %arg1: memref<16x784xf32, #tpu.memory_space<vmem>>, %arg2: memref<784x256xbf16, #tpu.memory_space<vmem>>, %arg3: memref<1x256xf32, #tpu.memory_space<vmem>>, %arg4: memref<256x256xbf16, #tpu.memory_space<vmem>>, %arg5: memref<1x256xf32, #tpu.memory_space<vmem>>, %arg6: memref<256x128xbf16, #tpu.memory_space<vmem>>, %arg7: memref<1x128xf32, #tpu.memory_space<vmem>>, %arg8: memref<16x128xf32, #tpu.memory_space<vmem>>) attributes {dimension_semantics = [#tpu.dimension_semantics<parallel>], iteration_bounds = array<i64: 1>, scalar_prefetch = 0 : i64, scratch_operands = 0 : i64, tpu.core_type = #tpu.core_type<tc>, window_params = [{transform_indices = @transform_0, window_bounds = array<i64: 16, 784>}, {pipeline_mode = #tpu.pipeline_mode<synchronous>, transform_indices = @transform_1, window_bounds = array<i64: 784, 256>}, {pipeline_mode = #tpu.pipeline_mode<synchronous>, transform_indices = @transform_2, window_bounds = array<i64: 1, 256>}, {pipeline_mode = #tpu.pipeline_mode<synchronous>, transform_indices = @transform_3, window_bounds = array<i64: 256, 256>}, {pipeline_mode = #tpu.pipeline_mode<synchronous>, transform_indices = @transform_4, window_bounds = array<i64: 1, 256>}, {pipeline_mode = #tpu.pipeline_mode<synchronous>, transform_indices = @transform_5, window_bounds = array<i64: 256, 128>}, {pipeline_mode = #tpu.pipeline_mode<synchronous>, transform_indices = @transform_6, window_bounds = array<i64: 1, 128>}, {transform_indices = @transform_7, window_bounds = array<i64: 16, 128>}]} {
    %c0 = arith.constant 0 : index
    %c0_0 = arith.constant 0 : index
    %0 = vector.load %arg1[%c0, %c0_0] : memref<16x784xf32, #tpu.memory_space<vmem>>, vector<16x784xf32>
    %1 = arith.truncf %0 : vector<16x784xf32> to vector<16x784xbf16>
    %c0_1 = arith.constant 0 : index
    %c0_2 = arith.constant 0 : index
    %2 = vector.load %arg2[%c0_1, %c0_2] : memref<784x256xbf16, #tpu.memory_space<vmem>>, vector<784x256xbf16>
    %cst = arith.constant dense<0.000000e+00> : vector<16x256xf32>
    %3 = tpu.matmul %1, %2, %cst {dimension_numbers = #tpu.dot_dimension_numbers<[1], [0], [0], [1], [0, 0, 1, 1], [], []>} : vector<16x784xbf16>, vector<784x256xbf16>, vector<16x256xf32> -> vector<16x256xf32>
    %c0_3 = arith.constant 0 : index
    %c0_4 = arith.constant 0 : index
    %4 = vector.load %arg3[%c0_3, %c0_4] : memref<1x256xf32, #tpu.memory_space<vmem>>, vector<1x256xf32>
    %5 = vector.broadcast %4 : vector<1x256xf32> to vector<16x256xf32>
    %6 = arith.addf %3, %5 : vector<16x256xf32>
    %cst_5 = arith.constant 0.000000e+00 : f32
    %7 = vector.broadcast %cst_5 : f32 to vector<16x256xf32>
    %8 = arith.maximumf %6, %7 : vector<16x256xf32>
    %9 = arith.truncf %8 : vector<16x256xf32> to vector<16x256xbf16>
    %c0_6 = arith.constant 0 : index
    %c0_7 = arith.constant 0 : index
    %10 = vector.load %arg4[%c0_6, %c0_7] : memref<256x256xbf16, #tpu.memory_space<vmem>>, vector<256x256xbf16>
    %cst_8 = arith.constant dense<0.000000e+00> : vector<16x256xf32>
    %11 = tpu.matmul %9, %10, %cst_8 {dimension_numbers = #tpu.dot_dimension_numbers<[1], [0], [0], [1], [0, 0, 1, 1], [], []>} : vector<16x256xbf16>, vector<256x256xbf16>, vector<16x256xf32> -> vector<16x256xf32>
    %c0_9 = arith.constant 0 : index
    %c0_10 = arith.constant 0 : index
    %12 = vector.load %arg5[%c0_9, %c0_10] : memref<1x256xf32, #tpu.memory_space<vmem>>, vector<1x256xf32>
    %13 = vector.broadcast %12 : vector<1x256xf32> to vector<16x256xf32>
    %14 = arith.addf %11, %13 : vector<16x256xf32>
    %cst_11 = arith.constant 0.000000e+00 : f32
    %15 = vector.broadcast %cst_11 : f32 to vector<16x256xf32>
    %16 = arith.maximumf %14, %15 : vector<16x256xf32>
    %17 = arith.truncf %16 : vector<16x256xf32> to vector<16x256xbf16>
    %c0_12 = arith.constant 0 : index
    %c0_13 = arith.constant 0 : index
    %18 = vector.load %arg6[%c0_12, %c0_13] : memref<256x128xbf16, #tpu.memory_space<vmem>>, vector<256x128xbf16>
    %cst_14 = arith.constant dense<0.000000e+00> : vector<16x128xf32>
    %19 = tpu.matmul %17, %18, %cst_14 {dimension_numbers = #tpu.dot_dimension_numbers<[1], [0], [0], [1], [0, 0, 1, 1], [], []>} : vector<16x256xbf16>, vector<256x128xbf16>, vector<16x128xf32> -> vector<16x128xf32>
    %c0_15 = arith.constant 0 : index
    %c0_16 = arith.constant 0 : index
    %20 = vector.load %arg7[%c0_15, %c0_16] : memref<1x128xf32, #tpu.memory_space<vmem>>, vector<1x128xf32>
    %21 = vector.broadcast %20 : vector<1x128xf32> to vector<16x128xf32>
    %22 = arith.addf %19, %21 : vector<16x128xf32>
    %c0_17 = arith.constant 0 : index
    %c0_18 = arith.constant 0 : index
    %23 = vector.load %arg8[%c0_17, %c0_18] : memref<16x128xf32, #tpu.memory_space<vmem>>, vector<16x128xf32>
    tpu.vector_store %arg8[%c0_17, %c0_18], %22 {strides = array<i32>} : memref<16x128xf32, #tpu.memory_space<vmem>>, vector<16x128xf32>,
    return
  }
  func.func @transform_0(%arg0: i32) -> (i32, i32) {
    %c0_i32 = arith.constant 0 : i32
    %c0_i32_0 = arith.constant 0 : i32
    return %arg0, %c0_i32 : i32, i32
  }
  func.func @transform_1(%arg0: i32) -> (i32, i32) {
    %c0_i32 = arith.constant 0 : i32
    %c0_i32_0 = arith.constant 0 : i32
    %c0_i32_1 = arith.constant 0 : i32
    return %c0_i32, %c0_i32_0 : i32, i32
  }
  func.func @transform_2(%arg0: i32) -> (i32, i32) {
    %c0_i32 = arith.constant 0 : i32
    %c0_i32_0 = arith.constant 0 : i32
    %c0_i32_1 = arith.constant 0 : i32
    return %c0_i32, %c0_i32_0 : i32, i32
  }
  func.func @transform_3(%arg0: i32) -> (i32, i32) {
    %c0_i32 = arith.constant 0 : i32
    %c0_i32_0 = arith.constant 0 : i32
    %c0_i32_1 = arith.constant 0 : i32
    return %c0_i32, %c0_i32_0 : i32, i32
  }
  func.func @transform_4(%arg0: i32) -> (i32, i32) {
    %c0_i32 = arith.constant 0 : i32
    %c0_i32_0 = arith.constant 0 : i32
    %c0_i32_1 = arith.constant 0 : i32
    return %c0_i32, %c0_i32_0 : i32, i32
  }
  func.func @transform_5(%arg0: i32) -> (i32, i32) {
    %c0_i32 = arith.constant 0 : i32
    %c0_i32_0 = arith.constant 0 : i32
    %c0_i32_1 = arith.constant 0 : i32
    return %c0_i32, %c0_i32_0 : i32, i32
  }
  func.func @transform_6(%arg0: i32) -> (i32, i32) {
    %c0_i32 = arith.constant 0 : i32
    %c0_i32_0 = arith.constant 0 : i32
    %c0_i32_1 = arith.constant 0 : i32
    return %c0_i32, %c0_i32_0 : i32, i32
  }
  func.func @transform_7(%arg0: i32) -> (i32, i32) {
    %c0_i32 = arith.constant 0 : i32
    %c0_i32_0 = arith.constant 0 : i32
    return %arg0, %c0_i32 : i32, i32
  }
}

</mosaic_0001>

<llo_original>
// kernel: tpu_custom_call.1
$region0: #{tpu_custom_call.1}
  #allocation0 [shape = 'u32[]', space=smem, size = 0x4, offset = 0x4, fixed_abs, tag = 'smem constant byte address 0x4 - core index']
  #allocation1 [shape = 'u32[144,128]{1,0:T(1,128)}', space=vmem, size = 0x12000, scoped, tag = 'internal scratch']
  %s0 = inlined_call_operand.hbm [shape: f32[16,784], index: 0, kind: input, shape index: {}]
  %s1 = inlined_call_operand.hbm [shape: bf16[784,256], index: 1, kind: input, shape index: {}]
  %s2 = inlined_call_operand.hbm [shape: f32[1,256], index: 2, kind: input, shape index: {}]
  %s3 = inlined_call_operand.hbm [shape: bf16[256,256], index: 3, kind: input, shape index: {}]
  %s4 = inlined_call_operand.hbm [shape: f32[1,256], index: 4, kind: input, shape index: {}]
  %s5 = inlined_call_operand.hbm [shape: bf16[256,128], index: 5, kind: input, shape index: {}]
  %s6 = inlined_call_operand.hbm [shape: f32[1,128], index: 6, kind: input, shape index: {}]
  %s7 = inlined_call_operand.hbm [shape: f32[16,128], index: 7, kind: output, shape index: {}]
  %s8 = sld [smem:[#allocation0]]
  $region66: #{tpu_custom_call.1} parent=0
    _
  %s10 = ssub.s32 1, %s8
  %s11 = scalar_select 0, %s10, %s8
  $region1: #{tpu_custom_call.1} parent=0
    #allocation2 [shape = 'u8[57344]{0}', space=vmem, size = 0xe000, scoped, tag = 'input window, operand 0, single buffered']
    #allocation3 [shape = 's32[1]{0}', space=sflag, size = 0x4, scoped, tag = 'scoped memory for tpu_custom_call.1']
    #allocation4 [shape = 's32[1]{0}', space=sflag, size = 0x4, scoped, tag = 'scoped memory for tpu_custom_call.1']
    #allocation5 [shape = 'u8[401408]{0}', space=vmem, size = 0x62000, scoped, tag = 'input window, operand 1, single buffered']
    #allocation6 [shape = 's32[1]{0}', space=sflag, size = 0x4, scoped, tag = 'scoped memory for tpu_custom_call.1']
    #allocation7 [shape = 'u8[1024]{0}', space=vmem, size = 0x400, scoped, tag = 'input window, operand 2, single buffered']
    #allocation8 [shape = 'u8[131072]{0}', space=vmem, size = 0x20000, scoped, tag = 'input window, operand 3, single buffered']
    #allocation9 [shape = 's32[1]{0}', space=sflag, size = 0x4, scoped, tag = 'scoped memory for tpu_custom_call.1']
    #allocation10 [shape = 'u8[1024]{0}', space=vmem, size = 0x400, scoped, tag = 'input window, operand 4, single buffered']
    #allocation11 [shape = 'u8[65536]{0}', space=vmem, size = 0x10000, scoped, tag = 'input window, operand 5, single buffered']
    #allocation12 [shape = 's32[1]{0}', space=sflag, size = 0x4, scoped, tag = 'scoped memory for tpu_custom_call.1']
    #allocation13 [shape = 'u8[512]{0}', space=vmem, size = 0x400, scoped, tag = 'input window, operand 6, single buffered']
    #allocation14 [shape = 'u8[8192]{0}', space=vmem, size = 0x2000, scoped, tag = 'output window, operand 0, single buffered']
    %12 = vsyncpa [#allocation3], 0
    %13 = vsyncpa [#allocation6], 0
    %14 = vsyncpa [#allocation9], 0
    %15 = vsyncpa [#allocation12], 0
    %16 = vsyncpa [#allocation4], 0
    // Predicated region
    $region2: #{tpu_custom_call.1} parent=1 // pred_check
      _
    $region3: #{tpu_custom_call.1} parent=1 // pred_check_branch
      %18 = sbr.rel (0) target = $region5
    $region4: #{tpu_custom_call.1} parent=1 // pred_region
      %s20 = ssub.s32 1792, 1792
      %21 = vsyncadd [#allocation3], %s20
      %s22 = sshll.u32 [#allocation2], 4
      %s23 = int_to_ptr.vmem [resolvable:$true] %s22
      %28 = dma.hbm_to_vmem [thread:$0]  %s0, 1792, %s23, [#allocation3], 896, 896, 56
    $region5: #{tpu_custom_call.1} parent=1 // pred_fallthru
      _
    // Predicated region
    $region6: #{tpu_custom_call.1} parent=1 // pred_check
      _
    $region7: #{tpu_custom_call.1} parent=1 // pred_check_branch
      %30 = sbr.rel (0) target = $region9
    $region8: #{tpu_custom_call.1} parent=1 // pred_region
      %s32 = ssub.s32 12544, 12544
      %33 = vsyncadd [#allocation6], %s32
      %s34 = sshll.u32 [#allocation5], 4
      %s35 = int_to_ptr.vmem [resolvable:$true] %s34
      %40 = dma.hbm_to_vmem [thread:$0]  %s1, 12544, %s35, [#allocation6], 128, 128, 8
    $region9: #{tpu_custom_call.1} parent=1 // pred_fallthru
      _
    // Predicated region
    $region10: #{tpu_custom_call.1} parent=1 // pred_check
      _
    $region11: #{tpu_custom_call.1} parent=1 // pred_check_branch
      %42 = sbr.rel (0) target = $region13
    $region12: #{tpu_custom_call.1} parent=1 // pred_region
      %s44 = ssub.s32 32, 32
      %45 = vsyncadd [#allocation6], %s44
      %s47 = sshll.u32 [#allocation7], 4
      %s48 = int_to_ptr.vmem [resolvable:$true] %s47
      %50 = dma.hbm_to_vmem [thread:$0]  %s2, 32, %s48, [#allocation6]
    $region13: #{tpu_custom_call.1} parent=1 // pred_fallthru
      _
    // Predicated region
    $region14: #{tpu_custom_call.1} parent=1 // pred_check
      _
    $region15: #{tpu_custom_call.1} parent=1 // pred_check_branch
      %52 = sbr.rel (0) target = $region17
    $region16: #{tpu_custom_call.1} parent=1 // pred_region
      %s54 = ssub.s32 4096, 4096
      %55 = vsyncadd [#allocation9], %s54
      %s56 = sshll.u32 [#allocation8], 4
      %s57 = int_to_ptr.vmem [resolvable:$true] %s56
      %62 = dma.hbm_to_vmem [thread:$0]  %s3, 4096, %s57, [#allocation9], 128, 128, 8
    $region17: #{tpu_custom_call.1} parent=1 // pred_fallthru
      _
    // Predicated region
    $region18: #{tpu_custom_call.1} parent=1 // pred_check
      _
    $region19: #{tpu_custom_call.1} parent=1 // pred_check_branch
      %64 = sbr.rel (0) target = $region21
    $region20: #{tpu_custom_call.1} parent=1 // pred_region
      %s66 = ssub.s32 32, 32
      %67 = vsyncadd [#allocation9], %s66
      %s69 = sshll.u32 [#allocation10], 4
      %s70 = int_to_ptr.vmem [resolvable:$true] %s69
      %72 = dma.hbm_to_vmem [thread:$0]  %s4, 32, %s70, [#allocation9]
    $region21: #{tpu_custom_call.1} parent=1 // pred_fallthru
      _
    // Predicated region
    $region22: #{tpu_custom_call.1} parent=1 // pred_check
      _
    $region23: #{tpu_custom_call.1} parent=1 // pred_check_branch
      %74 = sbr.rel (0) target = $region25
    $region24: #{tpu_custom_call.1} parent=1 // pred_region
      %s76 = ssub.s32 2048, 2048
      %77 = vsyncadd [#allocation12], %s76
      %s78 = sshll.u32 [#allocation11], 4
      %s79 = int_to_ptr.vmem [resolvable:$true] %s78
      %84 = dma.hbm_to_vmem [thread:$0]  %s5, 2048, %s79, [#allocation12], 64, 64, 4
    $region25: #{tpu_custom_call.1} parent=1 // pred_fallthru
      _
    // Predicated region
    $region26: #{tpu_custom_call.1} parent=1 // pred_check
      _
    $region27: #{tpu_custom_call.1} parent=1 // pred_check_branch
      %86 = sbr.rel (0) target = $region29
    $region28: #{tpu_custom_call.1} parent=1 // pred_region
      %s88 = ssub.s32 16, 16
      %89 = vsyncadd [#allocation12], %s88
      %s91 = sshll.u32 [#allocation13], 4
      %s92 = int_to_ptr.vmem [resolvable:$true] %s91
      %94 = dma.hbm_to_vmem [thread:$0]  %s6, 16, %s92, [#allocation12]
    $region29: #{tpu_custom_call.1} parent=1 // pred_fallthru
      _
    // Predicated region
    $region30: #{tpu_custom_call.1} parent=1 // pred_check
      _
    $region31: #{tpu_custom_call.1} parent=1 // pred_check_branch
      %96 = sbr.rel (0) target = $region33
    $region32: #{tpu_custom_call.1} parent=1 // pred_region
      %97 = dma.done [#allocation3], 1792
    $region33: #{tpu_custom_call.1} parent=1 // pred_fallthru
      _
    // Predicated region
    $region34: #{tpu_custom_call.1} parent=1 // pred_check
      _
    $region35: #{tpu_custom_call.1} parent=1 // pred_check_branch
      %99 = sbr.rel (0) target = $region37
    $region36: #{tpu_custom_call.1} parent=1 // pred_region
      %100 = dma.done [#allocation6], 12544
    $region37: #{tpu_custom_call.1} parent=1 // pred_fallthru
      _
    // Predicated region
    $region38: #{tpu_custom_call.1} parent=1 // pred_check
      _
    $region39: #{tpu_custom_call.1} parent=1 // pred_check_branch
      %102 = sbr.rel (0) target = $region41
    $region40: #{tpu_custom_call.1} parent=1 // pred_region
      %103 = dma.done [#allocation6], 32
    $region41: #{tpu_custom_call.1} parent=1 // pred_fallthru
      _
    // Predicated region
    $region42: #{tpu_custom_call.1} parent=1 // pred_check
      _
    $region43: #{tpu_custom_call.1} parent=1 // pred_check_branch
      %105 = sbr.rel (0) target = $region45
    $region44: #{tpu_custom_call.1} parent=1 // pred_region
      %106 = dma.done [#allocation9], 4096
    $region45: #{tpu_custom_call.1} parent=1 // pred_fallthru
      _
    // Predicated region
    $region46: #{tpu_custom_call.1} parent=1 // pred_check
      _
    $region47: #{tpu_custom_call.1} parent=1 // pred_check_branch
      %108 = sbr.rel (0) target = $region49
    $region48: #{tpu_custom_call.1} parent=1 // pred_region
      %109 = dma.done [#allocation9], 32
    $region49: #{tpu_custom_call.1} parent=1 // pred_fallthru
      _
    // Predicated region
    $region50: #{tpu_custom_call.1} parent=1 // pred_check
      _
    $region51: #{tpu_custom_call.1} parent=1 // pred_check_branch
      %111 = sbr.rel (0) target = $region53
    $region52: #{tpu_custom_call.1} parent=1 // pred_region
      %112 = dma.done [#allocation12], 2048
    $region53: #{tpu_custom_call.1} parent=1 // pred_fallthru
      _
    // Predicated region
    $region54: #{tpu_custom_call.1} parent=1 // pred_check
      _
    $region55: #{tpu_custom_call.1} parent=1 // pred_check_branch
      %114 = sbr.rel (0) target = $region57
    $region56: #{tpu_custom_call.1} parent=1 // pred_region
      %115 = dma.done [#allocation12], 16
    $region57: #{tpu_custom_call.1} parent=1 // pred_fallthru
      _
    %v117 = vld [vmem:[#allocation2] sm:$0xff]
    %v118 = vld [vmem:[#allocation2 + $0x8] sm:$0xff]
    %v119 = vld [vmem:[#allocation2 + $0x10] sm:$0xff]
    %v120 = vld [vmem:[#allocation2 + $0x18] sm:$0xff]
    %v121 = vld [vmem:[#allocation2 + $0x20] sm:$0xff]
    %v122 = vld [vmem:[#allocation2 + $0x28] sm:$0xff]
    %v123 = vld [vmem:[#allocation2 + $0x30] sm:$0xff]
    %v124 = vld [vmem:[#allocation2 + $0x38] sm:$0xff]
    %v125 = vld [vmem:[#allocation2 + $0x40] sm:$0xff]
    %v126 = vld [vmem:[#allocation2 + $0x48] sm:$0xff]
    %v127 = vld [vmem:[#allocation2 + $0x50] sm:$0xff]
    %v128 = vld [vmem:[#allocation2 + $0x58] sm:$0xff]
    %v129 = vld [vmem:[#allocation2 + $0x60] sm:$0xff]
    %v130 = vld [vmem:[#allocation2 + $0x68] sm:$0xff]
    %v131 = vpack.c.bf16 %v124, %v117
    %v132 = vpack.c.bf16 %v125, %v118
    %v133 = vpack.c.bf16 %v126, %v119
    %v134 = vpack.c.bf16 %v127, %v120
    %v135 = vpack.c.bf16 %v128, %v121
    %v136 = vpack.c.bf16 %v129, %v122
    %v137 = vpack.c.bf16 %v130, %v123
    %v138 = vld [vmem:[#allocation5] sm:$0xff]
    %v139 = vld [vmem:[#allocation5 + $0x8] sm:$0xff]
    %v140 = vld [vmem:[#allocation5 + $0x10] sm:$0xff]
    %v141 = vld [vmem:[#allocation5 + $0x18] sm:$0xff]
    %v142 = vld [vmem:[#allocation5 + $0x20] sm:$0xff]
    %v143 = vld [vmem:[#allocation5 + $0x28] sm:$0xff]
    %v144 = vld [vmem:[#allocation5 + $0x30] sm:$0xff]
    %v145 = vld [vmem:[#allocation5 + $0x38] sm:$0xff]
    %v146 = vld [vmem:[#allocation5 + $0x40] sm:$0xff]
    %v147 = vld [vmem:[#allocation5 + $0x48] sm:$0xff]
    %v148 = vld [vmem:[#allocation5 + $0x50] sm:$0xff]
    %v149 = vld [vmem:[#allocation5 + $0x58] sm:$0xff]
    %v150 = vld [vmem:[#allocation5 + $0x60] sm:$0xff]
    %v151 = vld [vmem:[#allocation5 + $0x68] sm:$0xff]
    %v152 = vld [vmem:[#allocation5 + $0x70] sm:$0xff]
    %v153 = vld [vmem:[#allocation5 + $0x78] sm:$0xff]
    %v154 = vld [vmem:[#allocation5 + $0x80] sm:$0xff]
    %v155 = vld [vmem:[#allocation5 + $0x88] sm:$0xff]
    %v156 = vld [vmem:[#allocation5 + $0x90] sm:$0xff]
    %v157 = vld [vmem:[#allocation5 + $0x98] sm:$0xff]
    %v158 = vld [vmem:[#allocation5 + $0xa0] sm:$0xff]
    %v159 = vld [vmem:[#allocation5 + $0xa8] sm:$0xff]
    %v160 = vld [vmem:[#allocation5 + $0xb0] sm:$0xff]
    %v161 = vld [vmem:[#allocation5 + $0xb8] sm:$0xff]
    %v162 = vld [vmem:[#allocation5 + $0xc0] sm:$0xff]
    %v163 = vld [vmem:[#allocation5 + $0xc8] sm:$0xff]
    %v164 = vld [vmem:[#allocation5 + $0xd0] sm:$0xff]
    %v165 = vld [vmem:[#allocation5 + $0xd8] sm:$0xff]
    %v166 = vld [vmem:[#allocation5 + $0xe0] sm:$0xff]
    %v167 = vld [vmem:[#allocation5 + $0xe8] sm:$0xff]
    %v168 = vld [vmem:[#allocation5 + $0xf0] sm:$0xff]
    %v169 = vld [vmem:[#allocation5 + $0xf8] sm:$0xff]
    %v170 = vld [vmem:[#allocation5 + $0x100] sm:$0xff]
    %v171 = vld [vmem:[#allocation5 + $0x108] sm:$0xff]
    %v172 = vld [vmem:[#allocation5 + $0x110] sm:$0xff]
    %v173 = vld [vmem:[#allocation5 + $0x118] sm:$0xff]
    %v174 = vld [vmem:[#allocation5 + $0x120] sm:$0xff]
    %v175 = vld [vmem:[#allocation5 + $0x128] sm:$0xff]
    %v176 = vld [vmem:[#allocation5 + $0x130] sm:$0xff]
    %v177 = vld [vmem:[#allocation5 + $0x138] sm:$0xff]
    %v178 = vld [vmem:[#allocation5 + $0x140] sm:$0xff]
    %v179 = vld [vmem:[#allocation5 + $0x148] sm:$0xff]
    %v180 = vld [vmem:[#allocation5 + $0x150] sm:$0xff]
    %v181 = vld [vmem:[#allocation5 + $0x158] sm:$0xff]
    %v182 = vld [vmem:[#allocation5 + $0x160] sm:$0xff]
    %v183 = vld [vmem:[#allocation5 + $0x168] sm:$0xff]
    %v184 = vld [vmem:[#allocation5 + $0x170] sm:$0xff]
    %v185 = vld [vmem:[#allocation5 + $0x178] sm:$0xff]
    %v186 = vld [vmem:[#allocation5 + $0x180] sm:$0xff]
    %v187 = vld [vmem:[#allocation5 + $0x188] sm:$0xff]
    %v188 = vld [vmem:[#allocation5 + $0x190] sm:$0xff]
    %v189 = vld [vmem:[#allocation5 + $0x198] sm:$0xff]
    %v190 = vld [vmem:[#allocation5 + $0x1a0] sm:$0xff]
    %v191 = vld [vmem:[#allocation5 + $0x1a8] sm:$0xff]
    %v192 = vld [vmem:[#allocation5 + $0x1b0] sm:$0xff]
    %v193 = vld [vmem:[#allocation5 + $0x1b8] sm:$0xff]
    %v194 = vld [vmem:[#allocation5 + $0x1c0] sm:$0xff]
    %v195 = vld [vmem:[#allocation5 + $0x1c8] sm:$0xff]
    %v196 = vld [vmem:[#allocation5 + $0x1d0] sm:$0xff]
    %v197 = vld [vmem:[#allocation5 + $0x1d8] sm:$0xff]
    %v198 = vld [vmem:[#allocation5 + $0x1e0] sm:$0xff]
    %v199 = vld [vmem:[#allocation5 + $0x1e8] sm:$0xff]
    %v200 = vld [vmem:[#allocation5 + $0x1f0] sm:$0xff]
    %v201 = vld [vmem:[#allocation5 + $0x1f8] sm:$0xff]
    %v202 = vld [vmem:[#allocation5 + $0x200] sm:$0xff]
    %v203 = vld [vmem:[#allocation5 + $0x208] sm:$0xff]
    %v204 = vld [vmem:[#allocation5 + $0x210] sm:$0xff]
    %v205 = vld [vmem:[#allocation5 + $0x218] sm:$0xff]
    %v206 = vld [vmem:[#allocation5 + $0x220] sm:$0xff]
    %v207 = vld [vmem:[#allocation5 + $0x228] sm:$0xff]
    %v208 = vld [vmem:[#allocation5 + $0x230] sm:$0xff]
    %v209 = vld [vmem:[#allocation5 + $0x238] sm:$0xff]
    %v210 = vld [vmem:[#allocation5 + $0x240] sm:$0xff]
    %v211 = vld [vmem:[#allocation5 + $0x248] sm:$0xff]
    %v212 = vld [vmem:[#allocation5 + $0x250] sm:$0xff]
    %v213 = vld [vmem:[#allocation5 + $0x258] sm:$0xff]
    %v214 = vld [vmem:[#allocation5 + $0x260] sm:$0xff]
    %v215 = vld [vmem:[#allocation5 + $0x268] sm:$0xff]
    %v216 = vld [vmem:[#allocation5 + $0x270] sm:$0xff]
    %v217 = vld [vmem:[#allocation5 + $0x278] sm:$0xff]
    %v218 = vld [vmem:[#allocation5 + $0x280] sm:$0xff]
    %v219 = vld [vmem:[#allocation5 + $0x288] sm:$0xff]
    %v220 = vld [vmem:[#allocation5 + $0x290] sm:$0xff]
    %v221 = vld [vmem:[#allocation5 + $0x298] sm:$0xff]
    %v222 = vld [vmem:[#allocation5 + $0x2a0] sm:$0xff]
    %v223 = vld [vmem:[#allocation5 + $0x2a8] sm:$0xff]
    %v224 = vld [vmem:[#allocation5 + $0x2b0] sm:$0xff]
    %v225 = vld [vmem:[#allocation5 + $0x2b8] sm:$0xff]
    %v226 = vld [vmem:[#allocation5 + $0x2c0] sm:$0xff]
    %v227 = vld [vmem:[#allocation5 + $0x2c8] sm:$0xff]
    %v228 = vld [vmem:[#allocation5 + $0x2d0] sm:$0xff]
    %v229 = vld [vmem:[#allocation5 + $0x2d8] sm:$0xff]
    %v230 = vld [vmem:[#allocation5 + $0x2e0] sm:$0xff]
    %v231 = vld [vmem:[#allocation5 + $0x2e8] sm:$0xff]
    %v232 = vld [vmem:[#allocation5 + $0x2f0] sm:$0xff]
    %v233 = vld [vmem:[#allocation5 + $0x2f8] sm:$0xff]
    %v234 = vld [vmem:[#allocation5 + $0x300] sm:$0xff]
    %v235 = vld [vmem:[#allocation5 + $0x308] sm:$0xff]
    %v236 = vld [vmem:[#allocation7] sm:$0x3]
    %v238 = vlaneseq
    %v239 = vshrl.u32 %v238, 7
    %v240 = vsub.s32 0, %v239
    %v241 = vrot.slane %v236, %v240
    %v242 = vlaneseq
    %v243 = vshrl.u32 %v242, 7
    %v244 = vsub.s32 1, %v243
    %v245 = vrot.slane %v236, %v244
    %v346 = vunpack.c.l.b16 %v138
    %v347 = vunpack.c.h.b16 %v138
    %v348 = vunpack.c.l.b16 %v139
    %v349 = vunpack.c.h.b16 %v139
    %v350 = vunpack.c.l.b16 %v140
    %v351 = vunpack.c.h.b16 %v140
    %v352 = vunpack.c.l.b16 %v141
    %v353 = vunpack.c.h.b16 %v141
    %v354 = vunpack.c.l.b16 %v142
    %v355 = vunpack.c.h.b16 %v142
    %v356 = vunpack.c.l.b16 %v143
    %v357 = vunpack.c.h.b16 %v143
    %v358 = vunpack.c.l.b16 %v144
    %v359 = vunpack.c.h.b16 %v144
    %v360 = vunpack.c.l.b16 %v145
    %v361 = vunpack.c.h.b16 %v145
    %v362 = vunpack.c.l.b16 %v146
    %v363 = vunpack.c.h.b16 %v146
    %v364 = vunpack.c.l.b16 %v147
    %v365 = vunpack.c.h.b16 %v147
    %v366 = vunpack.c.l.b16 %v148
    %v367 = vunpack.c.h.b16 %v148
    %v368 = vunpack.c.l.b16 %v149
    %v369 = vunpack.c.h.b16 %v149
    %v370 = vunpack.c.l.b16 %v150
    %v371 = vunpack.c.h.b16 %v150
    %v372 = vunpack.c.l.b16 %v151
    %v373 = vunpack.c.h.b16 %v151
    %v374 = vunpack.c.l.b16 %v152
    %v375 = vunpack.c.h.b16 %v152
    %v376 = vunpack.c.l.b16 %v153
    %v377 = vunpack.c.h.b16 %v153
    %v378 = vunpack.c.l.b16 %v154
    %v379 = vunpack.c.h.b16 %v154
    %v380 = vunpack.c.l.b16 %v155
    %v381 = vunpack.c.h.b16 %v155
    %v382 = vunpack.c.l.b16 %v156
    %v383 = vunpack.c.h.b16 %v156
    %v384 = vunpack.c.l.b16 %v157
    %v385 = vunpack.c.h.b16 %v157
    %v386 = vunpack.c.l.b16 %v158
    %v387 = vunpack.c.h.b16 %v158
    %v388 = vunpack.c.l.b16 %v159
    %v389 = vunpack.c.h.b16 %v159
    %v390 = vunpack.c.l.b16 %v160
    %v391 = vunpack.c.h.b16 %v160
    %v392 = vunpack.c.l.b16 %v161
    %v393 = vunpack.c.h.b16 %v161
    %v394 = vunpack.c.l.b16 %v162
    %v395 = vunpack.c.h.b16 %v162
    %v396 = vunpack.c.l.b16 %v163
    %v397 = vunpack.c.h.b16 %v163
    %v398 = vunpack.c.l.b16 %v164
    %v399 = vunpack.c.h.b16 %v164
    %v400 = vunpack.c.l.b16 %v165
    %v401 = vunpack.c.h.b16 %v165
    %v402 = vunpack.c.l.b16 %v166
    %v403 = vunpack.c.h.b16 %v166
    %v404 = vunpack.c.l.b16 %v167
    %v405 = vunpack.c.h.b16 %v167
    %v406 = vunpack.c.l.b16 %v168
    %v407 = vunpack.c.h.b16 %v168
    %v408 = vunpack.c.l.b16 %v169
    %v409 = vunpack.c.h.b16 %v169
    %v410 = vunpack.c.l.b16 %v170
    %v411 = vunpack.c.h.b16 %v170
    %v412 = vunpack.c.l.b16 %v171
    %v413 = vunpack.c.h.b16 %v171
    %v414 = vunpack.c.l.b16 %v172
    %v415 = vunpack.c.h.b16 %v172
    %v416 = vunpack.c.l.b16 %v173
    %v417 = vunpack.c.h.b16 %v173
    %v418 = vunpack.c.l.b16 %v174
    %v419 = vunpack.c.h.b16 %v174
    %v420 = vunpack.c.l.b16 %v175
    %v421 = vunpack.c.h.b16 %v175
    %v422 = vunpack.c.l.b16 %v176
    %v423 = vunpack.c.h.b16 %v176
    %v424 = vunpack.c.l.b16 %v177
    %v425 = vunpack.c.h.b16 %v177
    %v426 = vunpack.c.l.b16 %v178
    %v427 = vunpack.c.h.b16 %v178
    %v428 = vunpack.c.l.b16 %v179
    %v429 = vunpack.c.h.b16 %v179
    %v430 = vunpack.c.l.b16 %v180
    %v431 = vunpack.c.h.b16 %v180
    %v432 = vunpack.c.l.b16 %v181
    %v433 = vunpack.c.h.b16 %v181
    %v434 = vunpack.c.l.b16 %v182
    %v435 = vunpack.c.h.b16 %v182
    %v436 = vunpack.c.l.b16 %v183
    %v437 = vunpack.c.h.b16 %v183
    %v438 = vunpack.c.l.b16 %v184
    %v439 = vunpack.c.h.b16 %v184
    %v440 = vunpack.c.l.b16 %v185
    %v441 = vunpack.c.h.b16 %v185
    %v442 = vunpack.c.l.b16 %v186
    %v443 = vunpack.c.h.b16 %v186
    %v444 = vunpack.c.l.b16 %v187
    %v445 = vunpack.c.h.b16 %v187
    %v446 = vunpack.c.l.b16 %v188
    %v447 = vunpack.c.h.b16 %v188
    %v448 = vunpack.c.l.b16 %v189
    %v449 = vunpack.c.h.b16 %v189
    %v450 = vunpack.c.l.b16 %v190
    %v451 = vunpack.c.h.b16 %v190
    %v452 = vunpack.c.l.b16 %v191
    %v453 = vunpack.c.h.b16 %v191
    %v454 = vunpack.c.l.b16 %v192
    %v455 = vunpack.c.h.b16 %v192
    %v456 = vunpack.c.l.b16 %v193
    %v457 = vunpack.c.h.b16 %v193
    %v458 = vunpack.c.l.b16 %v194
    %v459 = vunpack.c.h.b16 %v194
    %v460 = vunpack.c.l.b16 %v195
    %v461 = vunpack.c.h.b16 %v195
    %v462 = vunpack.c.l.b16 %v196
    %v463 = vunpack.c.h.b16 %v196
    %v464 = vunpack.c.l.b16 %v197
    %v465 = vunpack.c.h.b16 %v197
    %v466 = vunpack.c.l.b16 %v198
    %v467 = vunpack.c.h.b16 %v198
    %v468 = vunpack.c.l.b16 %v199
    %v469 = vunpack.c.h.b16 %v199
    %v470 = vunpack.c.l.b16 %v200
    %v471 = vunpack.c.h.b16 %v200
    %v472 = vunpack.c.l.b16 %v201
    %v473 = vunpack.c.h.b16 %v201
    %v474 = vunpack.c.l.b16 %v202
    %v475 = vunpack.c.h.b16 %v202
    %v476 = vunpack.c.l.b16 %v203
    %v477 = vunpack.c.h.b16 %v203
    %v478 = vunpack.c.l.b16 %v204
    %v479 = vunpack.c.h.b16 %v204
    %v480 = vunpack.c.l.b16 %v205
    %v481 = vunpack.c.h.b16 %v205
    %v482 = vunpack.c.l.b16 %v206
    %v483 = vunpack.c.h.b16 %v206
    %v484 = vunpack.c.l.b16 %v207
    %v485 = vunpack.c.h.b16 %v207
    %v486 = vunpack.c.l.b16 %v208
    %v487 = vunpack.c.h.b16 %v208
    %v488 = vunpack.c.l.b16 %v209
    %v489 = vunpack.c.h.b16 %v209
    %v490 = vunpack.c.l.b16 %v210
    %v491 = vunpack.c.h.b16 %v210
    %v492 = vunpack.c.l.b16 %v211
    %v493 = vunpack.c.h.b16 %v211
    %v494 = vunpack.c.l.b16 %v212
    %v495 = vunpack.c.h.b16 %v212
    %v496 = vunpack.c.l.b16 %v213
    %v497 = vunpack.c.h.b16 %v213
    %v498 = vunpack.c.l.b16 %v214
    %v499 = vunpack.c.h.b16 %v214
    %v500 = vunpack.c.l.b16 %v215
    %v501 = vunpack.c.h.b16 %v215
    %v502 = vunpack.c.l.b16 %v216
    %v503 = vunpack.c.h.b16 %v216
    %v504 = vunpack.c.l.b16 %v217
    %v505 = vunpack.c.h.b16 %v217
    %v506 = vunpack.c.l.b16 %v218
    %v507 = vunpack.c.h.b16 %v218
    %v508 = vunpack.c.l.b16 %v219
    %v509 = vunpack.c.h.b16 %v219
    %v510 = vunpack.c.l.b16 %v220
    %v511 = vunpack.c.h.b16 %v220
    %v512 = vunpack.c.l.b16 %v221
    %v513 = vunpack.c.h.b16 %v221
    %v514 = vunpack.c.l.b16 %v222
    %v515 = vunpack.c.h.b16 %v222
    %v516 = vunpack.c.l.b16 %v223
    %v517 = vunpack.c.h.b16 %v223
    %v518 = vunpack.c.l.b16 %v224
    %v519 = vunpack.c.h.b16 %v224
    %v520 = vunpack.c.l.b16 %v225
    %v521 = vunpack.c.h.b16 %v225
    %v522 = vunpack.c.l.b16 %v226
    %v523 = vunpack.c.h.b16 %v226
    %v524 = vunpack.c.l.b16 %v227
    %v525 = vunpack.c.h.b16 %v227
    %v526 = vunpack.c.l.b16 %v228
    %v527 = vunpack.c.h.b16 %v228
    %v528 = vunpack.c.l.b16 %v229
    %v529 = vunpack.c.h.b16 %v229
    %v530 = vunpack.c.l.b16 %v230
    %v531 = vunpack.c.h.b16 %v230
    %v532 = vunpack.c.l.b16 %v231
    %v533 = vunpack.c.h.b16 %v231
    %v534 = vunpack.c.l.b16 %v232
    %v535 = vunpack.c.h.b16 %v232
    %v536 = vunpack.c.l.b16 %v233
    %v537 = vunpack.c.h.b16 %v233
    %v538 = vunpack.c.l.b16 %v234
    %v539 = vunpack.c.h.b16 %v234
    %v540 = vunpack.c.l.b16 %v235
    %v541 = vunpack.c.h.b16 %v235
    %v542 = vpack.c.b16 %v348, %v346
    %v543 = vpack.c.b16 %v349, %v347
    %v544 = vpack.c.b16 %v352, %v350
    %v545 = vpack.c.b16 %v353, %v351
    %v546 = vpack.c.b16 %v356, %v354
    %v547 = vpack.c.b16 %v357, %v355
    %v548 = vpack.c.b16 %v360, %v358
    %v549 = vpack.c.b16 %v361, %v359
    %v550 = vpack.c.b16 %v364, %v362
    %v551 = vpack.c.b16 %v365, %v363
    %v552 = vpack.c.b16 %v368, %v366
    %v553 = vpack.c.b16 %v369, %v367
    %v554 = vpack.c.b16 %v372, %v370
    %v555 = vpack.c.b16 %v373, %v371
    %v556 = vpack.c.b16 %v376, %v374
    %v557 = vpack.c.b16 %v377, %v375
    %v558 = vpack.c.b16 %v380, %v378
    %v559 = vpack.c.b16 %v381, %v379
    %v560 = vpack.c.b16 %v384, %v382
    %v561 = vpack.c.b16 %v385, %v383
    %v562 = vpack.c.b16 %v388, %v386
    %v563 = vpack.c.b16 %v389, %v387
    %v564 = vpack.c.b16 %v392, %v390
    %v565 = vpack.c.b16 %v393, %v391
    %v566 = vpack.c.b16 %v396, %v394
    %v567 = vpack.c.b16 %v397, %v395
    %v568 = vpack.c.b16 %v400, %v398
    %v569 = vpack.c.b16 %v401, %v399
    %v570 = vpack.c.b16 %v404, %v402
    %v571 = vpack.c.b16 %v405, %v403
    %v572 = vpack.c.b16 %v408, %v406
    %v573 = vpack.c.b16 %v409, %v407
    %v574 = vpack.c.b16 %v412, %v410
    %v575 = vpack.c.b16 %v413, %v411
    %v576 = vpack.c.b16 %v416, %v414
    %v577 = vpack.c.b16 %v417, %v415
    %v578 = vpack.c.b16 %v420, %v418
    %v579 = vpack.c.b16 %v421, %v419
    %v580 = vpack.c.b16 %v424, %v422
    %v581 = vpack.c.b16 %v425, %v423
    %v582 = vpack.c.b16 %v428, %v426
    %v583 = vpack.c.b16 %v429, %v427
    %v584 = vpack.c.b16 %v432, %v430
    %v585 = vpack.c.b16 %v433, %v431
    %v586 = vpack.c.b16 %v436, %v434
    %v587 = vpack.c.b16 %v437, %v435
    %v588 = vpack.c.b16 %v440, %v438
    %v589 = vpack.c.b16 %v441, %v439
    %v590 = vpack.c.b16 %v444, %v442
    %v591 = vpack.c.b16 %v445, %v443
    %v592 = vpack.c.b16 %v448, %v446
    %v593 = vpack.c.b16 %v449, %v447
    %v594 = vpack.c.b16 %v452, %v450
    %v595 = vpack.c.b16 %v453, %v451
    %v596 = vpack.c.b16 %v456, %v454
    %v597 = vpack.c.b16 %v457, %v455
    %v598 = vpack.c.b16 %v460, %v458
    %v599 = vpack.c.b16 %v461, %v459
    %v600 = vpack.c.b16 %v464, %v462
    %v601 = vpack.c.b16 %v465, %v463
    %v602 = vpack.c.b16 %v468, %v466
    %v603 = vpack.c.b16 %v469, %v467
    %v604 = vpack.c.b16 %v472, %v470
    %v605 = vpack.c.b16 %v473, %v471
    %v606 = vpack.c.b16 %v476, %v474
    %v607 = vpack.c.b16 %v477, %v475
    %v608 = vpack.c.b16 %v480, %v478
    %v609 = vpack.c.b16 %v481, %v479
    %v610 = vpack.c.b16 %v484, %v482
    %v611 = vpack.c.b16 %v485, %v483
    %v612 = vpack.c.b16 %v488, %v486
    %v613 = vpack.c.b16 %v489, %v487
    %v614 = vpack.c.b16 %v492, %v490
    %v615 = vpack.c.b16 %v493, %v491
    %v616 = vpack.c.b16 %v496, %v494
    %v617 = vpack.c.b16 %v497, %v495
    %v618 = vpack.c.b16 %v500, %v498
    %v619 = vpack.c.b16 %v501, %v499
    %v620 = vpack.c.b16 %v504, %v502
    %v621 = vpack.c.b16 %v505, %v503
    %v622 = vpack.c.b16 %v508, %v506
    %v623 = vpack.c.b16 %v509, %v507
    %v624 = vpack.c.b16 %v512, %v510
    %v625 = vpack.c.b16 %v513, %v511
    %v626 = vpack.c.b16 %v516, %v514
    %v627 = vpack.c.b16 %v517, %v515
    %v628 = vpack.c.b16 %v520, %v518
    %v629 = vpack.c.b16 %v521, %v519
    %v630 = vpack.c.b16 %v524, %v522
    %v631 = vpack.c.b16 %v525, %v523
    %v632 = vpack.c.b16 %v528, %v526
    %v633 = vpack.c.b16 %v529, %v527
    %v634 = vpack.c.b16 %v532, %v530
    %v635 = vpack.c.b16 %v533, %v531
    %v636 = vpack.c.b16 %v536, %v534
    %v637 = vpack.c.b16 %v537, %v535
    %v638 = vpack.c.b16 %v540, %v538
    %v639 = vpack.c.b16 %v541, %v539
    %vm738 = vcmask 130048
    %v740 = vsel %vm738, %v137, 0
    %742 = vmatprep.subr.bf16.mxu0 %v543
    %743 = vmatpush1.bf16.msra.mxu0 %v542
    %744 = vmatprep.subr.bf16.mxu0 %v545
    %745 = vmatpush1.bf16.msra.mxu0 %v544
    %746 = vmatprep.subr.bf16.mxu0 %v547
    %747 = vmatpush1.bf16.msra.mxu0 %v546
    %748 = vmatprep.subr.bf16.mxu0 %v549
    %749 = vmatpush1.bf16.msra.mxu0 %v548
    %750 = vmatprep.subr.bf16.mxu0 %v551
    %751 = vmatpush1.bf16.msra.mxu0 %v550
    %752 = vmatprep.subr.bf16.mxu0 %v553
    %753 = vmatpush1.bf16.msra.mxu0 %v552
    %754 = vmatprep.subr.bf16.mxu0 %v555
    %755 = vmatpush1.bf16.msra.mxu0 %v554
    %756 = vmatprep.subr.bf16.mxu0 %v557
    %757 = vmatpush1.bf16.msra.mxu0 %v556
    %758 = vmatprep.subr.bf16.mxu0 %v559
    %759 = vmatpush1.bf16.msra.mxu0 %v558
    %760 = vmatprep.subr.bf16.mxu0 %v561
    %761 = vmatpush1.bf16.msra.mxu0 %v560
    %762 = vmatprep.subr.bf16.mxu0 %v563
    %763 = vmatpush1.bf16.msra.mxu0 %v562
    %764 = vmatprep.subr.bf16.mxu0 %v565
    %765 = vmatpush1.bf16.msra.mxu0 %v564
    %766 = vmatprep.subr.bf16.mxu0 %v567
    %767 = vmatpush1.bf16.msra.mxu0 %v566
    %768 = vmatprep.subr.bf16.mxu0 %v569
    %769 = vmatpush1.bf16.msra.mxu0 %v568
    %770 = vmatprep.subr.bf16.mxu0 %v571
    %771 = vmatpush1.bf16.msra.mxu0 %v570
    %772 = vmatprep.subr.bf16.mxu0 %v573
    %773 = vmatpush1.bf16.msra.mxu0 %v572
    %774 = vmatprep.mubr.bf16.mxu0 %v132
    %775 = vmatmul.mubr.bf16.gmra.mrb[0].mxu0 %v131
    %v776 = vpop.f32.mrb[0].mxu0
    %v777 = vadd.f32 %v241, %v776
    %v778 = vpop.f32.mrb[0].mxu0
    %v779 = vadd.f32 %v245, %v778
    %v780 = vpop.f32.mrb[0].mxu0
    %v781 = vadd.f32 %v241, %v780
    %v782 = vpop.f32.mrb[0].mxu0
    %v783 = vadd.f32 %v245, %v782
    %784 = vdwg.mxu0
    %785 = vmatprep.subr.bf16.mxu0 %v575
    %786 = vmatpush1.bf16.msra.mxu0 %v574
    %787 = vmatprep.subr.bf16.mxu0 %v577
    %788 = vmatpush1.bf16.msra.mxu0 %v576
    %789 = vmatprep.subr.bf16.mxu0 %v579
    %790 = vmatpush1.bf16.msra.mxu0 %v578
    %791 = vmatprep.subr.bf16.mxu0 %v581
    %792 = vmatpush1.bf16.msra.mxu0 %v580
    %793 = vmatprep.subr.bf16.mxu0 %v583
    %794 = vmatpush1.bf16.msra.mxu0 %v582
    %795 = vmatprep.subr.bf16.mxu0 %v585
    %796 = vmatpush1.bf16.msra.mxu0 %v584
    %797 = vmatprep.subr.bf16.mxu0 %v587
    %798 = vmatpush1.bf16.msra.mxu0 %v586
    %799 = vmatprep.subr.bf16.mxu0 %v589
    %800 = vmatpush1.bf16.msra.mxu0 %v588
    %801 = vmatprep.subr.bf16.mxu0 %v591
    %802 = vmatpush1.bf16.msra.mxu0 %v590
    %803 = vmatprep.subr.bf16.mxu0 %v593
    %804 = vmatpush1.bf16.msra.mxu0 %v592
    %805 = vmatprep.subr.bf16.mxu0 %v595
    %806 = vmatpush1.bf16.msra.mxu0 %v594
    %807 = vmatprep.subr.bf16.mxu0 %v597
    %808 = vmatpush1.bf16.msra.mxu0 %v596
    %809 = vmatprep.subr.bf16.mxu0 %v599
    %810 = vmatpush1.bf16.msra.mxu0 %v598
    %811 = vmatprep.subr.bf16.mxu0 %v601
    %812 = vmatpush1.bf16.msra.mxu0 %v600
    %813 = vmatprep.subr.bf16.mxu0 %v603
    %814 = vmatpush1.bf16.msra.mxu0 %v602
    %815 = vmatprep.subr.bf16.mxu0 %v605
    %816 = vmatpush1.bf16.msra.mxu0 %v604
    %817 = vmatprep.mubr.bf16.mxu0 %v134
    %818 = vmatmul.mubr.bf16.gmra.mrb[0].mxu0 %v133
    %v819 = vpop.f32.mrb[0].mxu0
    %v820 = vadd.f32 %v777, %v819
    %v821 = vpop.f32.mrb[0].mxu0
    %v822 = vadd.f32 %v779, %v821
    %v823 = vpop.f32.mrb[0].mxu0
    %v824 = vadd.f32 %v781, %v823
    %v825 = vpop.f32.mrb[0].mxu0
    %v826 = vadd.f32 %v783, %v825
    %827 = vdwg.mxu0
    %828 = vmatprep.subr.bf16.mxu0 %v607
    %829 = vmatpush1.bf16.msra.mxu0 %v606
    %830 = vmatprep.subr.bf16.mxu0 %v609
    %831 = vmatpush1.bf16.msra.mxu0 %v608
    %832 = vmatprep.subr.bf16.mxu0 %v611
    %833 = vmatpush1.bf16.msra.mxu0 %v610
    %834 = vmatprep.subr.bf16.mxu0 %v613
    %835 = vmatpush1.bf16.msra.mxu0 %v612
    %836 = vmatprep.subr.bf16.mxu0 %v615
    %837 = vmatpush1.bf16.msra.mxu0 %v614
    %838 = vmatprep.subr.bf16.mxu0 %v617
    %839 = vmatpush1.bf16.msra.mxu0 %v616
    %840 = vmatprep.subr.bf16.mxu0 %v619
    %841 = vmatpush1.bf16.msra.mxu0 %v618
    %842 = vmatprep.subr.bf16.mxu0 %v621
    %843 = vmatpush1.bf16.msra.mxu0 %v620
    %844 = vmatprep.subr.bf16.mxu0 %v623
    %845 = vmatpush1.bf16.msra.mxu0 %v622
    %846 = vmatprep.subr.bf16.mxu0 %v625
    %847 = vmatpush1.bf16.msra.mxu0 %v624
    %848 = vmatprep.subr.bf16.mxu0 %v627
    %849 = vmatpush1.bf16.msra.mxu0 %v626
    %850 = vmatprep.subr.bf16.mxu0 %v629
    %851 = vmatpush1.bf16.msra.mxu0 %v628
    %852 = vmatprep.subr.bf16.mxu0 %v631
    %853 = vmatpush1.bf16.msra.mxu0 %v630
    %854 = vmatprep.subr.bf16.mxu0 %v633
    %855 = vmatpush1.bf16.msra.mxu0 %v632
    %856 = vmatprep.subr.bf16.mxu0 %v635
    %857 = vmatpush1.bf16.msra.mxu0 %v634
    %858 = vmatprep.subr.bf16.mxu0 %v637
    %859 = vmatpush1.bf16.msra.mxu0 %v636
    %860 = vmatprep.mubr.bf16.mxu0 %v136
    %861 = vmatmul.mubr.bf16.gmra.mrb[0].mxu0 %v135
    %v862 = vpop.f32.mrb[0].mxu0
    %v863 = vadd.f32 %v820, %v862
    %v864 = vpop.f32.mrb[0].mxu0
    %v865 = vadd.f32 %v822, %v864
    %v866 = vpop.f32.mrb[0].mxu0
    %v867 = vadd.f32 %v824, %v866
    %v868 = vpop.f32.mrb[0].mxu0
    %v869 = vadd.f32 %v826, %v868
    %870 = vdwg.mxu0
    %871 = vmatprep.subr.bf16.mxu0 %v639
    %872 = vmatpush1.bf16.msra.mxu0 %v638
    %873 = vmatprep.subr.bf16.mxu0 0
    %874 = vmatpush1.bf16.msra.mxu0 0
    %875 = vmatprep.subr.bf16.mxu0 0
    %876 = vmatpush1.bf16.msra.mxu0 0
    %877 = vmatprep.subr.bf16.mxu0 0
    %878 = vmatpush1.bf16.msra.mxu0 0
    %879 = vmatprep.subr.bf16.mxu0 0
    %880 = vmatpush1.bf16.msra.mxu0 0
    %881 = vmatprep.subr.bf16.mxu0 0
    %882 = vmatpush1.bf16.msra.mxu0 0
    %883 = vmatprep.subr.bf16.mxu0 0
    %884 = vmatpush1.bf16.msra.mxu0 0
    %885 = vmatprep.subr.bf16.mxu0 0
    %886 = vmatpush1.bf16.msra.mxu0 0
    %887 = vmatprep.subr.bf16.mxu0 0
    %888 = vmatpush1.bf16.msra.mxu0 0
    %889 = vmatprep.subr.bf16.mxu0 0
    %890 = vmatpush1.bf16.msra.mxu0 0
    %891 = vmatprep.subr.bf16.mxu0 0
    %892 = vmatpush1.bf16.msra.mxu0 0
    %893 = vmatprep.subr.bf16.mxu0 0
    %894 = vmatpush1.bf16.msra.mxu0 0
    %895 = vmatprep.subr.bf16.mxu0 0
    %896 = vmatpush1.bf16.msra.mxu0 0
    %897 = vmatprep.subr.bf16.mxu0 0
    %898 = vmatpush1.bf16.msra.mxu0 0
    %899 = vmatprep.subr.bf16.mxu0 0
    %900 = vmatpush1.bf16.msra.mxu0 0
    %901 = vmatprep.subr.bf16.mxu0 0
    %902 = vmatpush1.bf16.msra.mxu0 0
    %903 = vmatprep.mubr.bf16.mxu0 0
    %904 = vmatmul.mubr.bf16.gmra.mrb[0].mxu0 %v740
    %v905 = vpop.f32.mrb[0].mxu0
    %v906 = vadd.f32 %v863, %v905
    %v907 = vpop.f32.mrb[0].mxu0
    %v908 = vadd.f32 %v865, %v907
    %v909 = vpop.f32.mrb[0].mxu0
    %v910 = vadd.f32 %v867, %v909
    %v911 = vpop.f32.mrb[0].mxu0
    %v912 = vadd.f32 %v869, %v911
    %913 = vdwg.mxu0
    %v914 = vmax.f32 %v906, 0.0
    %v915 = vmax.f32 %v908, 0.0
    %v916 = vmax.f32 %v910, 0.0
    %v917 = vmax.f32 %v912, 0.0
    %v918 = vpack.c.bf16 %v916, %v914
    %v919 = vpack.c.bf16 %v917, %v915
    %v920 = vld [vmem:[#allocation8] sm:$0xff]
    %v921 = vld [vmem:[#allocation8 + $0x8] sm:$0xff]
    %v922 = vld [vmem:[#allocation8 + $0x10] sm:$0xff]
    %v923 = vld [vmem:[#allocation8 + $0x18] sm:$0xff]
    %v924 = vld [vmem:[#allocation8 + $0x20] sm:$0xff]
    %v925 = vld [vmem:[#allocation8 + $0x28] sm:$0xff]
    %v926 = vld [vmem:[#allocation8 + $0x30] sm:$0xff]
    %v927 = vld [vmem:[#allocation8 + $0x38] sm:$0xff]
    %v928 = vld [vmem:[#allocation8 + $0x40] sm:$0xff]
    %v929 = vld [vmem:[#allocation8 + $0x48] sm:$0xff]
    %v930 = vld [vmem:[#allocation8 + $0x50] sm:$0xff]
    %v931 = vld [vmem:[#allocation8 + $0x58] sm:$0xff]
    %v932 = vld [vmem:[#allocation8 + $0x60] sm:$0xff]
    %v933 = vld [vmem:[#allocation8 + $0x68] sm:$0xff]
    %v934 = vld [vmem:[#allocation8 + $0x70] sm:$0xff]
    %v935 = vld [vmem:[#allocation8 + $0x78] sm:$0xff]
    %v936 = vld [vmem:[#allocation8 + $0x80] sm:$0xff]
    %v937 = vld [vmem:[#allocation8 + $0x88] sm:$0xff]
    %v938 = vld [vmem:[#allocation8 + $0x90] sm:$0xff]
    %v939 = vld [vmem:[#allocation8 + $0x98] sm:$0xff]
    %v940 = vld [vmem:[#allocation8 + $0xa0] sm:$0xff]
    %v941 = vld [vmem:[#allocation8 + $0xa8] sm:$0xff]
    %v942 = vld [vmem:[#allocation8 + $0xb0] sm:$0xff]
    %v943 = vld [vmem:[#allocation8 + $0xb8] sm:$0xff]
    %v944 = vld [vmem:[#allocation8 + $0xc0] sm:$0xff]
    %v945 = vld [vmem:[#allocation8 + $0xc8] sm:$0xff]
    %v946 = vld [vmem:[#allocation8 + $0xd0] sm:$0xff]
    %v947 = vld [vmem:[#allocation8 + $0xd8] sm:$0xff]
    %v948 = vld [vmem:[#allocation8 + $0xe0] sm:$0xff]
    %v949 = vld [vmem:[#allocation8 + $0xe8] sm:$0xff]
    %v950 = vld [vmem:[#allocation8 + $0xf0] sm:$0xff]
    %v951 = vld [vmem:[#allocation8 + $0xf8] sm:$0xff]
    %v952 = vld [vmem:[#allocation10] sm:$0x3]
    %v954 = vlaneseq
    %v955 = vshrl.u32 %v954, 7
    %v956 = vsub.s32 0, %v955
    %v957 = vrot.slane %v952, %v956
    %v958 = vlaneseq
    %v959 = vshrl.u32 %v958, 7
    %v960 = vsub.s32 1, %v959
    %v961 = vrot.slane %v952, %v960
    %v996 = vunpack.c.l.b16 %v920
    %v997 = vunpack.c.h.b16 %v920
    %v998 = vunpack.c.l.b16 %v921
    %v999 = vunpack.c.h.b16 %v921
    %v1000 = vunpack.c.l.b16 %v922
    %v1001 = vunpack.c.h.b16 %v922
    %v1002 = vunpack.c.l.b16 %v923
    %v1003 = vunpack.c.h.b16 %v923
    %v1004 = vunpack.c.l.b16 %v924
    %v1005 = vunpack.c.h.b16 %v924
    %v1006 = vunpack.c.l.b16 %v925
    %v1007 = vunpack.c.h.b16 %v925
    %v1008 = vunpack.c.l.b16 %v926
    %v1009 = vunpack.c.h.b16 %v926
    %v1010 = vunpack.c.l.b16 %v927
    %v1011 = vunpack.c.h.b16 %v927
    %v1012 = vunpack.c.l.b16 %v928
    %v1013 = vunpack.c.h.b16 %v928
    %v1014 = vunpack.c.l.b16 %v929
    %v1015 = vunpack.c.h.b16 %v929
    %v1016 = vunpack.c.l.b16 %v930
    %v1017 = vunpack.c.h.b16 %v930
    %v1018 = vunpack.c.l.b16 %v931
    %v1019 = vunpack.c.h.b16 %v931
    %v1020 = vunpack.c.l.b16 %v932
    %v1021 = vunpack.c.h.b16 %v932
    %v1022 = vunpack.c.l.b16 %v933
    %v1023 = vunpack.c.h.b16 %v933
    %v1024 = vunpack.c.l.b16 %v934
    %v1025 = vunpack.c.h.b16 %v934
    %v1026 = vunpack.c.l.b16 %v935
    %v1027 = vunpack.c.h.b16 %v935
    %v1028 = vunpack.c.l.b16 %v936
    %v1029 = vunpack.c.h.b16 %v936
    %v1030 = vunpack.c.l.b16 %v937
    %v1031 = vunpack.c.h.b16 %v937
    %v1032 = vunpack.c.l.b16 %v938
    %v1033 = vunpack.c.h.b16 %v938
    %v1034 = vunpack.c.l.b16 %v939
    %v1035 = vunpack.c.h.b16 %v939
    %v1036 = vunpack.c.l.b16 %v940
    %v1037 = vunpack.c.h.b16 %v940
    %v1038 = vunpack.c.l.b16 %v941
    %v1039 = vunpack.c.h.b16 %v941
    %v1040 = vunpack.c.l.b16 %v942
    %v1041 = vunpack.c.h.b16 %v942
    %v1042 = vunpack.c.l.b16 %v943
    %v1043 = vunpack.c.h.b16 %v943
    %v1044 = vunpack.c.l.b16 %v944
    %v1045 = vunpack.c.h.b16 %v944
    %v1046 = vunpack.c.l.b16 %v945
    %v1047 = vunpack.c.h.b16 %v945
    %v1048 = vunpack.c.l.b16 %v946
    %v1049 = vunpack.c.h.b16 %v946
    %v1050 = vunpack.c.l.b16 %v947
    %v1051 = vunpack.c.h.b16 %v947
    %v1052 = vunpack.c.l.b16 %v948
    %v1053 = vunpack.c.h.b16 %v948
    %v1054 = vunpack.c.l.b16 %v949
    %v1055 = vunpack.c.h.b16 %v949
    %v1056 = vunpack.c.l.b16 %v950
    %v1057 = vunpack.c.h.b16 %v950
    %v1058 = vunpack.c.l.b16 %v951
    %v1059 = vunpack.c.h.b16 %v951
    %v1060 = vpack.c.b16 %v998, %v996
    %v1061 = vpack.c.b16 %v999, %v997
    %v1062 = vpack.c.b16 %v1002, %v1000
    %v1063 = vpack.c.b16 %v1003, %v1001
    %v1064 = vpack.c.b16 %v1006, %v1004
    %v1065 = vpack.c.b16 %v1007, %v1005
    %v1066 = vpack.c.b16 %v1010, %v1008
    %v1067 = vpack.c.b16 %v1011, %v1009
    %v1068 = vpack.c.b16 %v1014, %v1012
    %v1069 = vpack.c.b16 %v1015, %v1013
    %v1070 = vpack.c.b16 %v1018, %v1016
    %v1071 = vpack.c.b16 %v1019, %v1017
    %v1072 = vpack.c.b16 %v1022, %v1020
    %v1073 = vpack.c.b16 %v1023, %v1021
    %v1074 = vpack.c.b16 %v1026, %v1024
    %v1075 = vpack.c.b16 %v1027, %v1025
    %v1076 = vpack.c.b16 %v1030, %v1028
    %v1077 = vpack.c.b16 %v1031, %v1029
    %v1078 = vpack.c.b16 %v1034, %v1032
    %v1079 = vpack.c.b16 %v1035, %v1033
    %v1080 = vpack.c.b16 %v1038, %v1036
    %v1081 = vpack.c.b16 %v1039, %v1037
    %v1082 = vpack.c.b16 %v1042, %v1040
    %v1083 = vpack.c.b16 %v1043, %v1041
    %v1084 = vpack.c.b16 %v1046, %v1044
    %v1085 = vpack.c.b16 %v1047, %v1045
    %v1086 = vpack.c.b16 %v1050, %v1048
    %v1087 = vpack.c.b16 %v1051, %v1049
    %v1088 = vpack.c.b16 %v1054, %v1052
    %v1089 = vpack.c.b16 %v1055, %v1053
    %v1090 = vpack.c.b16 %v1058, %v1056
    %v1091 = vpack.c.b16 %v1059, %v1057
    %1124 = vmatprep.subr.bf16.mxu0 %v1061
    %1125 = vmatpush1.bf16.msra.mxu0 %v1060
    %1126 = vmatprep.subr.bf16.mxu0 %v1063
    %1127 = vmatpush1.bf16.msra.mxu0 %v1062
    %1128 = vmatprep.subr.bf16.mxu0 %v1065
    %1129 = vmatpush1.bf16.msra.mxu0 %v1064
    %1130 = vmatprep.subr.bf16.mxu0 %v1067
    %1131 = vmatpush1.bf16.msra.mxu0 %v1066
    %1132 = vmatprep.subr.bf16.mxu0 %v1069
    %1133 = vmatpush1.bf16.msra.mxu0 %v1068
    %1134 = vmatprep.subr.bf16.mxu0 %v1071
    %1135 = vmatpush1.bf16.msra.mxu0 %v1070
    %1136 = vmatprep.subr.bf16.mxu0 %v1073
    %1137 = vmatpush1.bf16.msra.mxu0 %v1072
    %1138 = vmatprep.subr.bf16.mxu0 %v1075
    %1139 = vmatpush1.bf16.msra.mxu0 %v1074
    %1140 = vmatprep.subr.bf16.mxu0 %v1077
    %1141 = vmatpush1.bf16.msra.mxu0 %v1076
    %1142 = vmatprep.subr.bf16.mxu0 %v1079
    %1143 = vmatpush1.bf16.msra.mxu0 %v1078
    %1144 = vmatprep.subr.bf16.mxu0 %v1081
    %1145 = vmatpush1.bf16.msra.mxu0 %v1080
    %1146 = vmatprep.subr.bf16.mxu0 %v1083
    %1147 = vmatpush1.bf16.msra.mxu0 %v1082
    %1148 = vmatprep.subr.bf16.mxu0 %v1085
    %1149 = vmatpush1.bf16.msra.mxu0 %v1084
    %1150 = vmatprep.subr.bf16.mxu0 %v1087
    %1151 = vmatpush1.bf16.msra.mxu0 %v1086
    %1152 = vmatprep.subr.bf16.mxu0 %v1089
    %1153 = vmatpush1.bf16.msra.mxu0 %v1088
    %1154 = vmatprep.subr.bf16.mxu0 %v1091
    %1155 = vmatpush1.bf16.msra.mxu0 %v1090
    %1156 = vmatprep.mubr.bf16.mxu0 %v919
    %1157 = vmatmul.mubr.bf16.gmra.mrb[0].mxu0 %v918
    %v1158 = vpop.f32.mrb[0].mxu0
    %v1159 = vadd.f32 %v957, %v1158
    %v1160 = vpop.f32.mrb[0].mxu0
    %v1161 = vadd.f32 %v961, %v1160
    %v1162 = vpop.f32.mrb[0].mxu0
    %v1163 = vadd.f32 %v957, %v1162
    %v1164 = vpop.f32.mrb[0].mxu0
    %v1165 = vadd.f32 %v961, %v1164
    %1166 = vdwg.mxu0
    %v1167 = vmax.f32 %v1159, 0.0
    %v1168 = vmax.f32 %v1161, 0.0
    %v1169 = vmax.f32 %v1163, 0.0
    %v1170 = vmax.f32 %v1165, 0.0
    %v1171 = vpack.c.bf16 %v1169, %v1167
    %v1172 = vpack.c.bf16 %v1170, %v1168
    %v1173 = vld [vmem:[#allocation11] sm:$0xf]
    %v1174 = vld [vmem:[#allocation11 + $0x4] sm:$0xf]
    %v1175 = vld [vmem:[#allocation11 + $0x8] sm:$0xf]
    %v1176 = vld [vmem:[#allocation11 + $0xc] sm:$0xf]
    %v1177 = vld [vmem:[#allocation11 + $0x10] sm:$0xf]
    %v1178 = vld [vmem:[#allocation11 + $0x14] sm:$0xf]
    %v1179 = vld [vmem:[#allocation11 + $0x18] sm:$0xf]
    %v1180 = vld [vmem:[#allocation11 + $0x1c] sm:$0xf]
    %v1181 = vld [vmem:[#allocation11 + $0x20] sm:$0xf]
    %v1182 = vld [vmem:[#allocation11 + $0x24] sm:$0xf]
    %v1183 = vld [vmem:[#allocation11 + $0x28] sm:$0xf]
    %v1184 = vld [vmem:[#allocation11 + $0x2c] sm:$0xf]
    %v1185 = vld [vmem:[#allocation11 + $0x30] sm:$0xf]
    %v1186 = vld [vmem:[#allocation11 + $0x34] sm:$0xf]
    %v1187 = vld [vmem:[#allocation11 + $0x38] sm:$0xf]
    %v1188 = vld [vmem:[#allocation11 + $0x3c] sm:$0xf]
    %v1189 = vld [vmem:[#allocation11 + $0x40] sm:$0xf]
    %v1190 = vld [vmem:[#allocation11 + $0x44] sm:$0xf]
    %v1191 = vld [vmem:[#allocation11 + $0x48] sm:$0xf]
    %v1192 = vld [vmem:[#allocation11 + $0x4c] sm:$0xf]
    %v1193 = vld [vmem:[#allocation11 + $0x50] sm:$0xf]
    %v1194 = vld [vmem:[#allocation11 + $0x54] sm:$0xf]
    %v1195 = vld [vmem:[#allocation11 + $0x58] sm:$0xf]
    %v1196 = vld [vmem:[#allocation11 + $0x5c] sm:$0xf]
    %v1197 = vld [vmem:[#allocation11 + $0x60] sm:$0xf]
    %v1198 = vld [vmem:[#allocation11 + $0x64] sm:$0xf]
    %v1199 = vld [vmem:[#allocation11 + $0x68] sm:$0xf]
    %v1200 = vld [vmem:[#allocation11 + $0x6c] sm:$0xf]
    %v1201 = vld [vmem:[#allocation11 + $0x70] sm:$0xf]
    %v1202 = vld [vmem:[#allocation11 + $0x74] sm:$0xf]
    %v1203 = vld [vmem:[#allocation11 + $0x78] sm:$0xf]
    %v1204 = vld [vmem:[#allocation11 + $0x7c] sm:$0xf]
    %v1205 = vld [vmem:[#allocation13] sm:$0x1]
    %v1207 = vlaneseq
    %v1208 = vshrl.u32 %v1207, 7
    %v1209 = vsub.s32 0, %v1208
    %v1210 = vrot.slane %v1205, %v1209
    %v1244 = vunpack.c.l.b16 %v1173
    %v1245 = vunpack.c.l.b16 %v1174
    %v1246 = vunpack.c.l.b16 %v1175
    %v1247 = vunpack.c.l.b16 %v1176
    %v1248 = vunpack.c.l.b16 %v1177
    %v1249 = vunpack.c.l.b16 %v1178
    %v1250 = vunpack.c.l.b16 %v1179
    %v1251 = vunpack.c.l.b16 %v1180
    %v1252 = vunpack.c.l.b16 %v1181
    %v1253 = vunpack.c.l.b16 %v1182
    %v1254 = vunpack.c.l.b16 %v1183
    %v1255 = vunpack.c.l.b16 %v1184
    %v1256 = vunpack.c.l.b16 %v1185
    %v1257 = vunpack.c.l.b16 %v1186
    %v1258 = vunpack.c.l.b16 %v1187
    %v1259 = vunpack.c.l.b16 %v1188
    %v1260 = vunpack.c.l.b16 %v1189
    %v1261 = vunpack.c.l.b16 %v1190
    %v1262 = vunpack.c.l.b16 %v1191
    %v1263 = vunpack.c.l.b16 %v1192
    %v1264 = vunpack.c.l.b16 %v1193
    %v1265 = vunpack.c.l.b16 %v1194
    %v1266 = vunpack.c.l.b16 %v1195
    %v1267 = vunpack.c.l.b16 %v1196
    %v1268 = vunpack.c.l.b16 %v1197
    %v1269 = vunpack.c.l.b16 %v1198
    %v1270 = vunpack.c.l.b16 %v1199
    %v1271 = vunpack.c.l.b16 %v1200
    %v1272 = vunpack.c.l.b16 %v1201
    %v1273 = vunpack.c.l.b16 %v1202
    %v1274 = vunpack.c.l.b16 %v1203
    %v1275 = vunpack.c.l.b16 %v1204
    %v1276 = vpack.c.b16 %v1245, %v1244
    %v1277 = vpack.c.b16 %v1247, %v1246
    %v1278 = vpack.c.b16 %v1249, %v1248
    %v1279 = vpack.c.b16 %v1251, %v1250
    %v1280 = vpack.c.b16 %v1253, %v1252
    %v1281 = vpack.c.b16 %v1255, %v1254
    %v1282 = vpack.c.b16 %v1257, %v1256
    %v1283 = vpack.c.b16 %v1259, %v1258
    %v1284 = vpack.c.b16 %v1261, %v1260
    %v1285 = vpack.c.b16 %v1263, %v1262
    %v1286 = vpack.c.b16 %v1265, %v1264
    %v1287 = vpack.c.b16 %v1267, %v1266
    %v1288 = vpack.c.b16 %v1269, %v1268
    %v1289 = vpack.c.b16 %v1271, %v1270
    %v1290 = vpack.c.b16 %v1273, %v1272
    %v1291 = vpack.c.b16 %v1275, %v1274
    %1308 = vmatprep.subr.bf16.mxu0 0
    %1309 = vmatpush1.bf16.msra.mxu0 %v1276
    %1310 = vmatprep.subr.bf16.mxu0 0
    %1311 = vmatpush1.bf16.msra.mxu0 %v1277
    %1312 = vmatprep.subr.bf16.mxu0 0
    %1313 = vmatpush1.bf16.msra.mxu0 %v1278
    %1314 = vmatprep.subr.bf16.mxu0 0
    %1315 = vmatpush1.bf16.msra.mxu0 %v1279
    %1316 = vmatprep.subr.bf16.mxu0 0
    %1317 = vmatpush1.bf16.msra.mxu0 %v1280
    %1318 = vmatprep.subr.bf16.mxu0 0
    %1319 = vmatpush1.bf16.msra.mxu0 %v1281
    %1320 = vmatprep.subr.bf16.mxu0 0
    %1321 = vmatpush1.bf16.msra.mxu0 %v1282
    %1322 = vmatprep.subr.bf16.mxu0 0
    %1323 = vmatpush1.bf16.msra.mxu0 %v1283
    %1324 = vmatprep.subr.bf16.mxu0 0
    %1325 = vmatpush1.bf16.msra.mxu0 %v1284
    %1326 = vmatprep.subr.bf16.mxu0 0
    %1327 = vmatpush1.bf16.msra.mxu0 %v1285
    %1328 = vmatprep.subr.bf16.mxu0 0
    %1329 = vmatpush1.bf16.msra.mxu0 %v1286
    %1330 = vmatprep.subr.bf16.mxu0 0
    %1331 = vmatpush1.bf16.msra.mxu0 %v1287
    %1332 = vmatprep.subr.bf16.mxu0 0
    %1333 = vmatpush1.bf16.msra.mxu0 %v1288
    %1334 = vmatprep.subr.bf16.mxu0 0
    %1335 = vmatpush1.bf16.msra.mxu0 %v1289
    %1336 = vmatprep.subr.bf16.mxu0 0
    %1337 = vmatpush1.bf16.msra.mxu0 %v1290
    %1338 = vmatprep.subr.bf16.mxu0 0
    %1339 = vmatpush1.bf16.msra.mxu0 %v1291
    %1340 = vmatprep.mubr.bf16.mxu0 %v1172
    %1341 = vmatmul.mubr.bf16.gmra.mrb[0].mxu0 %v1171
    %v1342 = vpop.f32.mrb[0].mxu0
    %v1343 = vadd.f32 %v1210, %v1342
    %v1344 = vpop.f32.mrb[0].mxu0
    %v1345 = vpop.f32.mrb[0].mxu0
    %v1346 = vadd.f32 %v1210, %v1345
    %v1347 = vpop.f32.mrb[0].mxu0
    %1348 = vdwg.mxu0
    %1349 = vst [vmem:[#allocation14] sm:$0xff] %v1343
    %1350 = vst [vmem:[#allocation14 + $0x8] sm:$0xff] %v1346
    // Predicated region
    $region58: #{tpu_custom_call.1} parent=1 // pred_check
      _
    $region59: #{tpu_custom_call.1} parent=1 // pred_check_branch
      %1352 = sbr.rel (0) target = $region61
    $region60: #{tpu_custom_call.1} parent=1 // pred_region
      %s1354 = ssub.s32 256, 256
      %1355 = vsyncadd [#allocation4], %s1354
      %s1356 = sshll.u32 [#allocation14], 4
      %s1357 = int_to_ptr.vmem [resolvable:$true] %s1356
      %1362 = dma.vmem_to_hbm [thread:$0]  %s1357, 256, %s7, [#allocation4], 128, 128, 8
    $region61: #{tpu_custom_call.1} parent=1 // pred_fallthru
      _
    // Predicated region
    $region62: #{tpu_custom_call.1} parent=1 // pred_check
      _
    $region63: #{tpu_custom_call.1} parent=1 // pred_check_branch
      %1364 = sbr.rel (0) target = $region65
    $region64: #{tpu_custom_call.1} parent=1 // pred_region
      %1365 = dma.done [#allocation4], 256
    $region65: #{tpu_custom_call.1} parent=1 // pred_fallthru
      _
    %1366 = vsyncpa [#allocation3], 1
    %1367 = vsyncpa [#allocation6], 1
    %1368 = vsyncpa [#allocation9], 1
    %1369 = vsyncpa [#allocation12], 1
    %1370 = vsyncpa [#allocation4], 1

</llo_original>
